<compile_context>
chip_gen: v5e
topology: v5e:2x2
jax: 0.10.0
libtpu: 0.0.40
codegen_flags: <defaults>
</compile_context>

<pallas_src>
import jax
import jax.numpy as jnp
from jax.experimental import pallas as pl
from jax.experimental.pallas import tpu as pltpu


def _round_up(x, m):
    return (x + m - 1) // m * m


def _mlp_kernel(x_ref, w1_ref, w2_ref, misc_ref, b3_ref, o_ref):
    """One batch tile of sigmoid(relu(relu(x@W1+b1)@W2+b2) . w3 + b3)."""
    h0_p = w1_ref.shape[1]          # padded hidden 0 (multiple of 128)
    h1_p = w2_ref.shape[1]          # padded hidden 1 (multiple of 128)

    # bf16 operands for the MXU; everything elementwise stays f32.
    x = x_ref[...].astype(jnp.bfloat16)                 # (tb, din)

    b1 = misc_ref[0:1, :h0_p]                           # f32 bias row
    b2 = misc_ref[1:2, :h1_p]                           # f32 bias row
    w3r = misc_ref[2:3, :h1_p]                          # f32 w3 row
    b3 = b3_ref[0]                                      # f32 scalar (SMEM)

    # Layer 1: Linear + ReLU  (Dropout is identity at inference).
    h = jnp.dot(x, w1_ref[...], preferred_element_type=jnp.float32)
    h = jnp.maximum(h + b1, 0.0)

    # Layer 2: Linear + ReLU  (Dropout is identity at inference).
    h = jnp.dot(h.astype(jnp.bfloat16), w2_ref[...],
                preferred_element_type=jnp.float32)
    h = jnp.maximum(h + b2, 0.0)

    # Layer 3: out_features == 1  ->  VPU/XLU reduction, not a 1-column matmul.
    y = jnp.sum(h * w3r, axis=-1) + b3                  # (tb,), f32
    y = jax.nn.sigmoid(y)

    # Lane-dense (1, tb) store into the (1, bp) output slab.
    o_ref[...] = y[None, :].astype(o_ref.dtype)


def pack_params(params):
    """PyTorch-layout params -> MXU-ready bf16 weight blocks + f32 bias block.

    Returns (w1_p, w2_p, misc, b3_arr):
      w1_p : (din,  h0_p) bf16  == W1.T, lane-padded with zeros
      w2_p : (h0_p, h1_p) bf16  == W2.T, independently padded (no square blow-up)
      misc : (8, max(h0_p, h1_p)) f32, rows = [b1, b2, w3, 0, ...]
      b3   : (1,) f32 scalar (lives in SMEM)
    """
    W1, b1, W2, b2, W3, b3 = params                     # W: (out, in), b: (out,)
    h0, din = W1.shape
    h1 = W2.shape[0]
    h0_p = _round_up(h0, 128)
    h1_p = _round_up(h1, 128)
    wlane = max(h0_p, h1_p)

    w1_p = jnp.zeros((din, h0_p), jnp.bfloat16).at[:, :h0].set(
        W1.T.astype(jnp.bfloat16))
    w2_p = jnp.zeros((h0_p, h1_p), jnp.bfloat16).at[:h0, :h1].set(
        W2.T.astype(jnp.bfloat16))

    misc = jnp.zeros((8, wlane), jnp.float32)
    misc = misc.at[0, :h0].set(b1.astype(jnp.float32))
    misc = misc.at[1, :h1].set(b2.astype(jnp.float32))
    misc = misc.at[2, :h1].set(W3.reshape(-1).astype(jnp.float32))
    b3_arr = b3.reshape(1).astype(jnp.float32)
    return w1_p, w2_p, misc, b3_arr


def personality_net_forward(x, params, *, max_tile=1024):
    """Fused MLP forward. x: [B, input_dim] -> [B, 1] float32.

    max_tile must be a multiple of 128; sweep {1024, 2048, 4096} for large B
    (keep it small enough that g = ceil(B/tb) >= 2 on v7x so the 'parallel'
    batch axis can shard across its two TensorCores).
    """
    assert max_tile % 128 == 0
    B, din = x.shape
    w1_p, w2_p, misc, b3_arr = pack_params(params)
    h0_p = w1_p.shape[1]
    h1_p = w2_p.shape[1]

    # Batch tile: single full-extent tile (rounded to the bf16 sublane tile of
    # 16) for small B, otherwise 128-multiple tiles -> unmasked lane-dense
    # output stores.
    if B <= max_tile:
        tb = _round_up(B, 16)
    else:
        tb = max_tile
    bp = _round_up(B, tb)
    g = bp // tb

    # Pad (and cast) only when there is a ragged tail; otherwise x streams
    # straight from HBM with no wrapper-side copy and is cast to bf16 on the
    # VMEM tile inside the kernel.
    if bp == B:
        xp = x
    else:
        xp = jnp.pad(x.astype(jnp.bfloat16), ((0, bp - B), (0, 0)))

    out_row = pl.pallas_call(
        _mlp_kernel,
        out_shape=jax.ShapeDtypeStruct((1, bp), jnp.float32),
        grid=(g,),
        in_specs=[
            pl.BlockSpec((tb, din), lambda i: (i, 0)),      # streamed x tiles
            pl.BlockSpec((din, h0_p), lambda i: (0, 0)),    # resident W1^T (bf16)
            pl.BlockSpec((h0_p, h1_p), lambda i: (0, 0)),   # resident W2^T (bf16)
            pl.BlockSpec(misc.shape, lambda i: (0, 0)),     # resident b1/b2/w3 (f32)
            pl.BlockSpec(memory_space=pltpu.SMEM),          # b3 scalar
        ],
        out_specs=pl.BlockSpec((1, tb), lambda i: (0, i)),  # lane-dense output row
        compiler_params=pltpu.CompilerParams(
            dimension_semantics=("parallel",)),
    )(xp, w1_p, w2_p, misc, b3_arr)

    return out_row.reshape(bp, 1)[:B]


def init_params(key, input_dim, hidden_sizes):
    """PyTorch-layout (out, in) params, nn.Linear-default-style uniform init."""
    h0, h1 = hidden_sizes
    ks = jax.random.split(key, 6)

    def linear(kw, kb, fan_in, fan_out):
        bound = 1.0 / jnp.sqrt(fan_in)
        W = jax.random.uniform(kw, (fan_out, fan_in), jnp.float32, -bound, bound)
        b = jax.random.uniform(kb, (fan_out,), jnp.float32, -bound, bound)
        return W, b

    W1, b1 = linear(ks[0], ks[1], input_dim, h0)
    W2, b2 = linear(ks[2], ks[3], h0, h1)
    W3, b3 = linear(ks[4], ks[5], h1, 1)
    return (W1, b1, W2, b2, W3, b3)


def reference_forward(x, params):
    """Plain-JAX f32 reference (PyTorch semantics: x @ W.T + b)."""
    W1, b1, W2, b2, W3, b3 = params
    h = jnp.maximum(x @ W1.T + b1, 0.0)
    h = jnp.maximum(h @ W2.T + b2, 0.0)
    return jax.nn.sigmoid(h @ W3.T + b3)


if __name__ == "__main__":
    key = jax.random.PRNGKey(0)
    k_x, k_p = jax.random.split(key)

    batch = 8
    input_dim = 32
    hidden_sizes = (64, 32)
    dropout_rate = 0.2  # inference mode -> identity; kept for API fidelity
    # TODO(synk): training-mode stochastic dropout masking is not implemented
    # (forward matches model.eval()).

    x = jax.random.normal(k_x, (batch, input_dim), dtype=jnp.float32)
    params = init_params(k_p, input_dim, hidden_sizes)

    out = personality_net_forward(x, params)
    out = jax.block_until_ready(out)

    ref = reference_forward(x, params)
    assert out.shape == (batch, 1)
    # Kernel uses bf16 MXU operands with f32 accumulation; vs. the f32
    # reference the post-sigmoid outputs agree to ~1e-3, well inside 2e-2.
    assert jnp.allclose(out, ref, atol=2e-2, rtol=2e-2), \
        float(jnp.max(jnp.abs(out - ref)))

    print("KERNEL_OK")
</pallas_src>

<mosaic_0001>
module attributes {stable_mosaic.version = 11 : i64} {
  func.func @_mlp_kernel(%arg0: i32, %arg1: memref<16x32xbf16, #tpu.memory_space<vmem>>, %arg2: memref<32x128xbf16, #tpu.memory_space<vmem>>, %arg3: memref<128x128xbf16, #tpu.memory_space<vmem>>, %arg4: memref<8x128xf32, #tpu.memory_space<vmem>>, %arg5: memref<1xf32, #tpu.memory_space<smem>>, %arg6: memref<1x16xf32, #tpu.memory_space<vmem>>) attributes {dimension_semantics = [#tpu.dimension_semantics<parallel>], iteration_bounds = array<i64: 1>, scalar_prefetch = 0 : i64, scratch_operands = 0 : i64, tpu.core_type = #tpu.core_type<tc>, window_params = [{transform_indices = @transform_0, window_bounds = array<i64: 16, 32>}, {pipeline_mode = #tpu.pipeline_mode<synchronous>, transform_indices = @transform_1, window_bounds = array<i64: 32, 128>}, {pipeline_mode = #tpu.pipeline_mode<synchronous>, transform_indices = @transform_2, window_bounds = array<i64: 128, 128>}, {pipeline_mode = #tpu.pipeline_mode<synchronous>, transform_indices = @transform_3, window_bounds = array<i64: 8, 128>}, {transform_indices = @transform_4, window_bounds = array<i64: 1>}, {transform_indices = @transform_5, window_bounds = array<i64: 1, 16>}]} {
    %c0 = arith.constant 0 : index
    %c0_0 = arith.constant 0 : index
    %0 = vector.load %arg1[%c0, %c0_0] : memref<16x32xbf16, #tpu.memory_space<vmem>>, vector<16x32xbf16>
    %c0_1 = arith.constant 0 : index
    %c0_2 = arith.constant 0 : index
    %1 = vector.load %arg4[%c0_1, %c0_2] : memref<8x128xf32, #tpu.memory_space<vmem>>, vector<1x128xf32>
    %c1 = arith.constant 1 : index
    %c0_3 = arith.constant 0 : index
    %2 = vector.load %arg4[%c1, %c0_3] : memref<8x128xf32, #tpu.memory_space<vmem>>, vector<1x128xf32>
    %c2 = arith.constant 2 : index
    %c0_4 = arith.constant 0 : index
    %3 = vector.load %arg4[%c2, %c0_4] : memref<8x128xf32, #tpu.memory_space<vmem>>, vector<1x128xf32>
    %c0_5 = arith.constant 0 : index
    %4 = memref.load %arg5[%c0_5] : memref<1xf32, #tpu.memory_space<smem>>
    %c0_6 = arith.constant 0 : index
    %c0_7 = arith.constant 0 : index
    %5 = vector.load %arg2[%c0_6, %c0_7] : memref<32x128xbf16, #tpu.memory_space<vmem>>, vector<32x128xbf16>
    %cst = arith.constant dense<0.000000e+00> : vector<16x128xf32>
    %6 = tpu.matmul %0, %5, %cst {dimension_numbers = #tpu.dot_dimension_numbers<[1], [0], [0], [1], [0, 0, 1, 1], [], []>} : vector<16x32xbf16>, vector<32x128xbf16>, vector<16x128xf32> -> vector<16x128xf32>
    %7 = vector.broadcast %1 : vector<1x128xf32> to vector<16x128xf32>
    %8 = arith.addf %6, %7 : vector<16x128xf32>
    %cst_8 = arith.constant 0.000000e+00 : f32
    %9 = vector.broadcast %cst_8 : f32 to vector<16x128xf32>
    %10 = arith.maximumf %8, %9 : vector<16x128xf32>
    %11 = arith.truncf %10 : vector<16x128xf32> to vector<16x128xbf16>
    %c0_9 = arith.constant 0 : index
    %c0_10 = arith.constant 0 : index
    %12 = vector.load %arg3[%c0_9, %c0_10] : memref<128x128xbf16, #tpu.memory_space<vmem>>, vector<128x128xbf16>
    %cst_11 = arith.constant dense<0.000000e+00> : vector<16x128xf32>
    %13 = tpu.matmul %11, %12, %cst_11 {dimension_numbers = #tpu.dot_dimension_numbers<[1], [0], [0], [1], [0, 0, 1, 1], [], []>} : vector<16x128xbf16>, vector<128x128xbf16>, vector<16x128xf32> -> vector<16x128xf32>
    %14 = vector.broadcast %2 : vector<1x128xf32> to vector<16x128xf32>
    %15 = arith.addf %13, %14 : vector<16x128xf32>
    %cst_12 = arith.constant 0.000000e+00 : f32
    %16 = vector.broadcast %cst_12 : f32 to vector<16x128xf32>
    %17 = arith.maximumf %15, %16 : vector<16x128xf32>
    %18 = vector.broadcast %3 : vector<1x128xf32> to vector<16x128xf32>
    %19 = arith.mulf %17, %18 : vector<16x128xf32>
    %cst_13 = arith.constant dense<0.000000e+00> : vector<16xf32>
    %20 = vector.multi_reduction <add>, %19, %cst_13 [1] : vector<16x128xf32> to vector<16xf32>
    %21 = vector.broadcast %4 : f32 to vector<16xf32>
    %22 = arith.addf %20, %21 : vector<16xf32>
    %23 = arith.negf %22 : vector<16xf32>
    %24 = math.exp %23 : vector<16xf32>
    %cst_14 = arith.constant 1.000000e+00 : f32
    %25 = vector.broadcast %cst_14 : f32 to vector<16xf32>
    %26 = arith.addf %25, %24 : vector<16xf32>
    %27 = arith.divf %25, %26 : vector<16xf32>
    %28 = vector.shape_cast %27 : vector<16xf32> to vector<1x16xf32>
    %c0_15 = arith.constant 0 : index
    %c0_16 = arith.constant 0 : index
    %29 = vector.load %arg6[%c0_15, %c0_16] : memref<1x16xf32, #tpu.memory_space<vmem>>, vector<1x16xf32>
    tpu.vector_store %arg6[%c0_15, %c0_16], %28 {strides = array<i32>} : memref<1x16xf32, #tpu.memory_space<vmem>>, vector<1x16xf32>,
    return
  }
  func.func @transform_0(%arg0: i32) -> (i32, i32) {
    %c0_i32 = arith.constant 0 : i32
    %c0_i32_0 = arith.constant 0 : i32
    return %arg0, %c0_i32 : i32, i32
  }
  func.func @transform_1(%arg0: i32) -> (i32, i32) {
    %c0_i32 = arith.constant 0 : i32
    %c0_i32_0 = arith.constant 0 : i32
    %c0_i32_1 = arith.constant 0 : i32
    return %c0_i32, %c0_i32_0 : i32, i32
  }
  func.func @transform_2(%arg0: i32) -> (i32, i32) {
    %c0_i32 = arith.constant 0 : i32
    %c0_i32_0 = arith.constant 0 : i32
    %c0_i32_1 = arith.constant 0 : i32
    return %c0_i32, %c0_i32_0 : i32, i32
  }
  func.func @transform_3(%arg0: i32) -> (i32, i32) {
    %c0_i32 = arith.constant 0 : i32
    %c0_i32_0 = arith.constant 0 : i32
    %c0_i32_1 = arith.constant 0 : i32
    return %c0_i32, %c0_i32_0 : i32, i32
  }
  func.func @transform_4(%arg0: i32) -> i32 {
    %c0_i32 = arith.constant 0 : i32
    %c0_i32_0 = arith.constant 0 : i32
    return %c0_i32 : i32
  }
  func.func @transform_5(%arg0: i32) -> (i32, i32) {
    %c0_i32 = arith.constant 0 : i32
    %c0_i32_0 = arith.constant 0 : i32
    return %c0_i32, %arg0 : i32, i32
  }
}

</mosaic_0001>

<llo_original>
// kernel: tpu_custom_call.1
$region0: #{tpu_custom_call.1}
  #allocation0 [shape = 'u32[]', space=smem, size = 0x4, offset = 0x4, fixed_abs, tag = 'smem constant byte address 0x4 - core index']
  #allocation1 [shape = 'u32[72,128]{1,0:T(1,128)}', space=vmem, size = 0x9000, scoped, tag = 'internal scratch']
  #allocation2 [shape = 'f32[1]{0:T(128)S(6)}', space=smem, size = 0x200, scoped, tag = 'scoped memory for tpu_custom_call.1']
  %s0 = inlined_call_operand.hbm [shape: bf16[16,32], index: 0, kind: input, shape index: {}]
  %s1 = inlined_call_operand.hbm [shape: bf16[32,128], index: 1, kind: input, shape index: {}]
  %s2 = inlined_call_operand.hbm [shape: bf16[128,128], index: 2, kind: input, shape index: {}]
  %s3 = inlined_call_operand.hbm [shape: f32[8,128], index: 3, kind: input, shape index: {}]
  %s4 = inlined_call_operand.<no memory space> [shape: f32[1], index: 4, kind: input, shape index: {}]
  %s5 = inlined_call_operand.hbm [shape: f32[1,16], index: 5, kind: output, shape index: {}]
  %s6 = sld [smem:[#allocation0]]
  $region46: #{tpu_custom_call.1} parent=0
    _
  %s8 = ssub.s32 1, %s6
  %s9 = scalar_select 0, %s8, %s6
  %10 = sst [smem:[#allocation2]] %s4
  $region1: #{tpu_custom_call.1} parent=0
    #allocation3 [shape = 'u8[4096]{0}', space=vmem, size = 0x1000, scoped, tag = 'input window, operand 0, single buffered']
    #allocation4 [shape = 's32[1]{0}', space=sflag, size = 0x4, scoped, tag = 'scoped memory for tpu_custom_call.1']
    #allocation5 [shape = 's32[1]{0}', space=sflag, size = 0x4, scoped, tag = 'scoped memory for tpu_custom_call.1']
    #allocation6 [shape = 'u8[8192]{0}', space=vmem, size = 0x2000, scoped, tag = 'input window, operand 1, single buffered']
    #allocation7 [shape = 's32[1]{0}', space=sflag, size = 0x4, scoped, tag = 'scoped memory for tpu_custom_call.1']
    #allocation8 [shape = 'u8[32768]{0}', space=vmem, size = 0x8000, scoped, tag = 'input window, operand 2, single buffered']
    #allocation9 [shape = 'u8[4096]{0}', space=vmem, size = 0x1000, scoped, tag = 'input window, operand 3, single buffered']
    #allocation10 [shape = 's32[1]{0}', space=sflag, size = 0x4, scoped, tag = 'scoped memory for tpu_custom_call.1']
    #allocation11 [shape = 'u8[512]{0}', space=vmem, size = 0x400, scoped, tag = 'output window, operand 0, single buffered']
    %11 = vsyncpa [#allocation4], 0
    %12 = vsyncpa [#allocation7], 0
    %13 = vsyncpa [#allocation10], 0
    %14 = vsyncpa [#allocation5], 0
    // Predicated region
    $region2: #{tpu_custom_call.1} parent=1 // pred_check
      _
    $region3: #{tpu_custom_call.1} parent=1 // pred_check_branch
      %16 = sbr.rel (0) target = $region5
    $region4: #{tpu_custom_call.1} parent=1 // pred_region
      %18 = vsyncadd [#allocation4], 0
      %s19 = sshll.u32 %s0, 4
      %s20 = int_to_ptr.hbm [resolvable:$true] %s19
      %s21 = sshll.u32 [#allocation3], 4
      %s22 = int_to_ptr.vmem [resolvable:$true] %s21
      %27 = dma.hbm_to_vmem [thread:$0]  %s20, 128, %s22, [#allocation4], 64, 64, 4
    $region5: #{tpu_custom_call.1} parent=1 // pred_fallthru
      _
    // Predicated region
    $region6: #{tpu_custom_call.1} parent=1 // pred_check
      _
    $region7: #{tpu_custom_call.1} parent=1 // pred_check_branch
      %29 = sbr.rel (0) target = $region9
    $region8: #{tpu_custom_call.1} parent=1 // pred_region
      %31 = vsyncadd [#allocation7], 0
      %s32 = sshll.u32 %s1, 4
      %s33 = int_to_ptr.hbm [resolvable:$true] %s32
      %s34 = sshll.u32 [#allocation6], 4
      %s35 = int_to_ptr.vmem [resolvable:$true] %s34
      %40 = dma.hbm_to_vmem [thread:$0]  %s33, 256, %s35, [#allocation7], 64, 64, 4
    $region9: #{tpu_custom_call.1} parent=1 // pred_fallthru
      _
    // Predicated region
    $region10: #{tpu_custom_call.1} parent=1 // pred_check
      _
    $region11: #{tpu_custom_call.1} parent=1 // pred_check_branch
      %42 = sbr.rel (0) target = $region13
    $region12: #{tpu_custom_call.1} parent=1 // pred_region
      %44 = vsyncadd [#allocation7], 0
      %s45 = sshll.u32 %s2, 4
      %s46 = int_to_ptr.hbm [resolvable:$true] %s45
      %s47 = sshll.u32 [#allocation8], 4
      %s48 = int_to_ptr.vmem [resolvable:$true] %s47
      %53 = dma.hbm_to_vmem [thread:$0]  %s46, 1024, %s48, [#allocation7], 64, 64, 4
    $region13: #{tpu_custom_call.1} parent=1 // pred_fallthru
      _
    // Predicated region
    $region14: #{tpu_custom_call.1} parent=1 // pred_check
      _
    $region15: #{tpu_custom_call.1} parent=1 // pred_check_branch
      %55 = sbr.rel (0) target = $region17
    $region16: #{tpu_custom_call.1} parent=1 // pred_region
      %57 = vsyncadd [#allocation10], 0
      %s59 = sshll.u32 %s3, 4
      %s60 = int_to_ptr.hbm [resolvable:$true] %s59
      %s61 = sshll.u32 [#allocation9], 4
      %s62 = int_to_ptr.vmem [resolvable:$true] %s61
      %64 = dma.hbm_to_vmem [thread:$0]  %s60, 128, %s62, [#allocation10]
    $region17: #{tpu_custom_call.1} parent=1 // pred_fallthru
      _
    // Predicated region
    $region18: #{tpu_custom_call.1} parent=1 // pred_check
      _
    $region19: #{tpu_custom_call.1} parent=1 // pred_check_branch
      %66 = sbr.rel (0) target = $region21
    $region20: #{tpu_custom_call.1} parent=1 // pred_region
      _
    $region21: #{tpu_custom_call.1} parent=1 // pred_fallthru
      _
    // Predicated region
    $region22: #{tpu_custom_call.1} parent=1 // pred_check
      _
    $region23: #{tpu_custom_call.1} parent=1 // pred_check_branch
      %68 = sbr.rel (0) target = $region25
    $region24: #{tpu_custom_call.1} parent=1 // pred_region
      %70 = dma.done [#allocation4], 128
    $region25: #{tpu_custom_call.1} parent=1 // pred_fallthru
      _
    // Predicated region
    $region26: #{tpu_custom_call.1} parent=1 // pred_check
      _
    $region27: #{tpu_custom_call.1} parent=1 // pred_check_branch
      %72 = sbr.rel (0) target = $region29
    $region28: #{tpu_custom_call.1} parent=1 // pred_region
      %74 = dma.done [#allocation7], 256
    $region29: #{tpu_custom_call.1} parent=1 // pred_fallthru
      _
    // Predicated region
    $region30: #{tpu_custom_call.1} parent=1 // pred_check
      _
    $region31: #{tpu_custom_call.1} parent=1 // pred_check_branch
      %76 = sbr.rel (0) target = $region33
    $region32: #{tpu_custom_call.1} parent=1 // pred_region
      %78 = dma.done [#allocation7], 1024
    $region33: #{tpu_custom_call.1} parent=1 // pred_fallthru
      _
    // Predicated region
    $region34: #{tpu_custom_call.1} parent=1 // pred_check
      _
    $region35: #{tpu_custom_call.1} parent=1 // pred_check_branch
      %80 = sbr.rel (0) target = $region37
    $region36: #{tpu_custom_call.1} parent=1 // pred_region
      %82 = dma.done [#allocation10], 128
    $region37: #{tpu_custom_call.1} parent=1 // pred_fallthru
      _
    %v84 = vld [vmem:[#allocation3] sm:$0xf]
    %v85 = vld [vmem:[#allocation3 + $0x4] sm:$0xf]
    %v86 = vld [vmem:[#allocation9] sm:$0x1]
    %v87 = vld [vmem:[#allocation9 + $0x1] sm:$0x1]
    %v88 = vld [vmem:[#allocation9 + $0x2] sm:$0x1]
    %s89 = sld [smem:[#allocation2]]
    %v90 = vld [vmem:[#allocation6] sm:$0xf]
    %v91 = vld [vmem:[#allocation6 + $0x4] sm:$0xf]
    %v92 = vld [vmem:[#allocation6 + $0x8] sm:$0xf]
    %v93 = vld [vmem:[#allocation6 + $0xc] sm:$0xf]
    %v94 = vperm.slane %v86, 0
    %v97 = vunpack.c.l.b16 %v84
    %v98 = vunpack.c.l.b16 %v85
    %v99 = vpack.c.b16 %v98, %v97
    %v104 = vunpack.c.l.b16 %v90
    %v105 = vunpack.c.l.b16 %v91
    %v106 = vunpack.c.l.b16 %v92
    %v107 = vunpack.c.l.b16 %v93
    %v108 = vpack.c.b16 %v105, %v104
    %v109 = vpack.c.b16 %v107, %v106
    %vm112 = vcmask 261120
    %v114 = vsel %vm112, %v99, 0
    %116 = vmatpush.bf16.msra.mxu0 0
    %117 = vmatpush.bf16.msra.mxu0 0
    %118 = vmatpush.bf16.msra.mxu0 0
    %119 = vmatpush.bf16.msra.mxu0 0
    %120 = vmatpush.bf16.msra.mxu0 0
    %121 = vmatpush.bf16.msra.mxu0 0
    %122 = vmatpush.bf16.msra.mxu0 %v109
    %123 = vmatpush.bf16.msra.mxu0 %v108
    %124 = vmatmul.bf16.gmra.mxu0 %v114
    %v125 = vpop.f32.mrf.mxu0
    %v126 = vadd.f32 %v94, %v125
    %v127 = vpop.f32.mrf.mxu0
    %v128 = vadd.f32 %v94, %v127
    %129 = vdwg.mxu0
    %v130 = vmax.f32 %v126, 0.0
    %v131 = vmax.f32 %v128, 0.0
    %v132 = vpack.c.bf16 %v131, %v130
    %v133 = vld [vmem:[#allocation8] sm:$0xf]
    %v134 = vld [vmem:[#allocation8 + $0x4] sm:$0xf]
    %v135 = vld [vmem:[#allocation8 + $0x8] sm:$0xf]
    %v136 = vld [vmem:[#allocation8 + $0xc] sm:$0xf]
    %v137 = vld [vmem:[#allocation8 + $0x10] sm:$0xf]
    %v138 = vld [vmem:[#allocation8 + $0x14] sm:$0xf]
    %v139 = vld [vmem:[#allocation8 + $0x18] sm:$0xf]
    %v140 = vld [vmem:[#allocation8 + $0x1c] sm:$0xf]
    %v141 = vld [vmem:[#allocation8 + $0x20] sm:$0xf]
    %v142 = vld [vmem:[#allocation8 + $0x24] sm:$0xf]
    %v143 = vld [vmem:[#allocation8 + $0x28] sm:$0xf]
    %v144 = vld [vmem:[#allocation8 + $0x2c] sm:$0xf]
    %v145 = vld [vmem:[#allocation8 + $0x30] sm:$0xf]
    %v146 = vld [vmem:[#allocation8 + $0x34] sm:$0xf]
    %v147 = vld [vmem:[#allocation8 + $0x38] sm:$0xf]
    %v148 = vld [vmem:[#allocation8 + $0x3c] sm:$0xf]
    %v149 = vperm.slane %v87, 0
    %v166 = vunpack.c.l.b16 %v133
    %v167 = vunpack.c.l.b16 %v134
    %v168 = vunpack.c.l.b16 %v135
    %v169 = vunpack.c.l.b16 %v136
    %v170 = vunpack.c.l.b16 %v137
    %v171 = vunpack.c.l.b16 %v138
    %v172 = vunpack.c.l.b16 %v139
    %v173 = vunpack.c.l.b16 %v140
    %v174 = vunpack.c.l.b16 %v141
    %v175 = vunpack.c.l.b16 %v142
    %v176 = vunpack.c.l.b16 %v143
    %v177 = vunpack.c.l.b16 %v144
    %v178 = vunpack.c.l.b16 %v145
    %v179 = vunpack.c.l.b16 %v146
    %v180 = vunpack.c.l.b16 %v147
    %v181 = vunpack.c.l.b16 %v148
    %v182 = vpack.c.b16 %v167, %v166
    %v183 = vpack.c.b16 %v169, %v168
    %v184 = vpack.c.b16 %v171, %v170
    %v185 = vpack.c.b16 %v173, %v172
    %v186 = vpack.c.b16 %v175, %v174
    %v187 = vpack.c.b16 %v177, %v176
    %v188 = vpack.c.b16 %v179, %v178
    %v189 = vpack.c.b16 %v181, %v180
    %198 = vmatpush.bf16.msra.mxu0 %v189
    %199 = vmatpush.bf16.msra.mxu0 %v188
    %200 = vmatpush.bf16.msra.mxu0 %v187
    %201 = vmatpush.bf16.msra.mxu0 %v186
    %202 = vmatpush.bf16.msra.mxu0 %v185
    %203 = vmatpush.bf16.msra.mxu0 %v184
    %204 = vmatpush.bf16.msra.mxu0 %v183
    %205 = vmatpush.bf16.msra.mxu0 %v182
    %206 = vmatmul.bf16.gmra.mxu0 %v132
    %v207 = vpop.f32.mrf.mxu0
    %v208 = vadd.f32 %v149, %v207
    %v209 = vpop.f32.mrf.mxu0
    %v210 = vadd.f32 %v149, %v209
    %211 = vdwg.mxu0
    %v212 = vmax.f32 %v208, 0.0
    %v213 = vmax.f32 %v210, 0.0
    %v214 = vperm.slane %v88, 0
    %v215 = vmul.f32 %v212, %v214
    %v216 = vmul.f32 %v213, %v214
    %217 = vadd.xlane.f32.xlu0 %v215
    %v218 = vpop.xlane.xlu0 %217
    %219 = vadd.xlane.f32.xlu0 %v216
    %v220 = vpop.xlane.xlu0 %219
    %v221 = vstv %s89
    %v222 = vadd.f32 %v218, %v221
    %v223 = vadd.f32 %v220, %v221
    %v224 = vxor.u32 %v222, 2147483648
    %v225 = vxor.u32 %v223, 2147483648
    %v226 = vmul.f32 %v224, 1.442695
    %v227 = vpow.pop %v226
    %v228 = vmul.f32 %v225, 1.442695
    %v229 = vpow.pop %v228
    %v230 = vadd.f32 %v227, 1.0
    %v231 = vadd.f32 %v229, 1.0
    %v232 = vrcp.pop %v230
    %v233 = vmul.f32 %v230, %v232
    %v234 = vsub.f32 1.0, %v233
    %v235 = vmul.f32 %v232, %v234
    %v236 = vadd.f32 %v232, %v235
    %vm237 = vweird.f32 %v230
    %vm238 = vweird.f32 %v232
    %vm239 = vmor %vm237, %vm238
    %v240 = vsel %vm239, %v232, %v236
    %v241 = vand.u32 2147483647, %v230
    %vm242 = vcmp.eq.f32.partialorder %v241, 8.507059e+37
    %v243 = vand.u32 %v230, 2147483648
    %v244 = vor.u32 1.1754944e-38, %v243
    %v245 = vsel %vm242, %v244, %v240
    %v246 = vmul.f32 1.0, %v245
    %v247 = vrcp.pop %v231
    %v248 = vmul.f32 %v231, %v247
    %v249 = vsub.f32 1.0, %v248
    %v250 = vmul.f32 %v247, %v249
    %v251 = vadd.f32 %v247, %v250
    %vm252 = vweird.f32 %v231
    %vm253 = vweird.f32 %v247
    %vm254 = vmor %vm252, %vm253
    %v255 = vsel %vm254, %v247, %v251
    %v256 = vand.u32 2147483647, %v231
    %vm257 = vcmp.eq.f32.partialorder %v256, 8.507059e+37
    %v258 = vand.u32 %v231, 2147483648
    %v259 = vor.u32 1.1754944e-38, %v258
    %v260 = vsel %vm257, %v259, %v255
    %v261 = vmul.f32 1.0, %v260
    %v264 = vlaneseq
    %v265 = vand.u32 %v264, 127
    %v266 = vperm.slane %v246, %v265
    %v267 = vadd.s32 %v265, 4294967288
    %v268 = vperm.slane %v261, %v267
    %vm269 = vcmask 130112
    %v270 = vsel %vm269, %v268, %v266
    %vm272 = vcmask 122880
    %273 = vst.msk [vmem:[#allocation11] sm:$0x1] %vm272, %v270
    // Predicated region
    $region38: #{tpu_custom_call.1} parent=1 // pred_check
      _
    $region39: #{tpu_custom_call.1} parent=1 // pred_check_branch
      %275 = sbr.rel (0) target = $region41
    $region40: #{tpu_custom_call.1} parent=1 // pred_region
      %277 = vsyncadd [#allocation5], 0
      %s279 = sshll.u32 [#allocation11], 4
      %s280 = int_to_ptr.vmem [resolvable:$true] %s279
      %s281 = sshll.u32 %s5, 4
      %s282 = int_to_ptr.hbm [resolvable:$true] %s281
      %284 = dma.vmem_to_hbm [thread:$0]  %s280, 16, %s282, [#allocation5]
    $region41: #{tpu_custom_call.1} parent=1 // pred_fallthru
      _
    // Predicated region
    $region42: #{tpu_custom_call.1} parent=1 // pred_check
      _
    $region43: #{tpu_custom_call.1} parent=1 // pred_check_branch
      %286 = sbr.rel (0) target = $region45
    $region44: #{tpu_custom_call.1} parent=1 // pred_region
      %288 = dma.done [#allocation5], 16
    $region45: #{tpu_custom_call.1} parent=1 // pred_fallthru
      _
    %289 = vsyncpa [#allocation4], 1
    %290 = vsyncpa [#allocation7], 1
    %291 = vsyncpa [#allocation10], 1
    %292 = vsyncpa [#allocation5], 1

</llo_original>
